<compile_context>
chip_gen: v6e
topology: v6e:2x2x1
jax: 0.10.0
libtpu: 0.0.40
codegen_flags: <defaults>
</compile_context>

<pallas_src>
import math
import functools

import jax
import jax.numpy as jnp
from jax.experimental import pallas as pl
from jax.experimental.pallas import tpu as pltpu


def _arc_margin_kernel(xn_ref, w_ref, winv_ref, label_ref, o_ref, *,
                       scale, cos_m, sin_m, th, mm, easy_margin, ls_eps,
                       out_features, block_c):
    """Computes one (TB, TC) output tile of ArcMarginProduct.forward.

    xn_ref:    (TB, D)  pre-normalized input rows (matmul dtype)
    w_ref:     (TC, D)  raw (un-normalized) weight rows (matmul dtype)
    winv_ref:  (1, TC)  f32 precomputed 1/||w_j||
    label_ref: (TB, 1)  int32 labels (-1 for padded rows)
    """
    j = pl.program_id(0)                       # C-tile index (outer grid axis)

    # cosine = (x_hat @ W^T) * (1/||w||).  Contraction on the last dim of both
    # operands feeds the MXU in its native transposed-RHS form (no transpose).
    raw = jax.lax.dot_general(
        xn_ref[...], w_ref[...],
        dimension_numbers=(((1,), (1,)), ((), ())),
        preferred_element_type=jnp.float32)                    # (TB, TC) f32
    cosine = raw * winv_ref[...]                               # (1,TC) bcast

    # Arc margin.  Clamp the sqrt argument: |cosine| can exceed 1 by ULPs.
    sine = jnp.sqrt(jnp.maximum(1.0 - cosine * cosine, 0.0))
    phi = cosine * cos_m - sine * sin_m
    if easy_margin:
        phi = jnp.where(cosine > 0.0, phi, cosine)
    else:
        phi = jnp.where(cosine > th, phi, cosine - mm)

    # One-hot blend.  Shift the (TB,1) labels into tile-local column space
    # instead of offsetting the full (TB,TC) iota.
    local_label = label_ref[...] - j * block_c                 # (TB, 1)
    col = jax.lax.broadcasted_iota(jnp.int32, cosine.shape, 1)
    is_target = col == local_label                             # (TB, TC)
    if ls_eps > 0.0:
        one_hot = jnp.where(is_target, 1.0 - ls_eps, 0.0) + ls_eps / out_features
        out = (cosine + one_hot * (phi - cosine)) * scale
    else:
        out = jnp.where(is_target, phi, cosine) * scale        # no one-hot temp
    o_ref[...] = out.astype(o_ref.dtype)


def _round_up(n, m):
    return ((n + m - 1) // m) * m


def arc_margin_product(x, weight, label, *, scale=30.0, margin=0.5,
                       easy_margin=False, ls_eps=0.0,
                       block_b=None, block_c=None,
                       matmul_dtype=None, out_dtype=jnp.float32):
    """ArcMarginProduct.forward(input, label) in Pallas.

    x:      (B, in_features) float32
    weight: (out_features, in_features) float32 or bfloat16
    label:  (B,) int
    returns (B, out_features) out_dtype (default float32)

    matmul_dtype: dtype the MXU matmul runs in.  Default bfloat16 (f32
      accumulation, f32 epilogue) — full MXU rate and half the W HBM stream.
      Pass jnp.float32 for closest parity with the PyTorch f32 module.
    """
    B, D = x.shape
    C, D2 = weight.shape
    assert D == D2

    if matmul_dtype is None:
        matmul_dtype = jnp.bfloat16
    matmul_dtype = jnp.dtype(matmul_dtype)

    # Tile sizes: sublane multiple of 8, lane multiple of 128.
    if block_b is None:
        block_b = min(256, _round_up(B, 8))
    if block_c is None:
        block_c = min(1024, _round_up(C, 128))
    assert block_b % 8 == 0 and block_c % 128 == 0

    B_pad = _round_up(B, block_b)
    C_pad = _round_up(C, block_c)

    eps_sq = 1e-24                               # (F.normalize eps = 1e-12)^2

    # Hoisted out of the kernel (feedback): normalize x once, and fold
    # 1/||w_j|| into a tiny (1, C_pad) vector instead of normalizing W.
    x32 = x.astype(jnp.float32)
    x_ss = jnp.sum(x32 * x32, axis=-1, keepdims=True)
    xn = (x32 * jax.lax.rsqrt(jnp.maximum(x_ss, eps_sq))).astype(matmul_dtype)

    w32 = weight.astype(jnp.float32)
    w_ss = jnp.sum(w32 * w32, axis=-1)
    w_inv = jax.lax.rsqrt(jnp.maximum(w_ss, eps_sq)).reshape(1, C)

    wp = weight.astype(matmul_dtype)

    if B_pad != B:
        xn = jnp.pad(xn, ((0, B_pad - B), (0, 0)))
    if C_pad != C:
        wp = jnp.pad(wp, ((0, C_pad - C), (0, 0)))
        w_inv = jnp.pad(w_inv, ((0, 0), (0, C_pad - C)))
    lp = label.astype(jnp.int32)
    if B_pad != B:
        lp = jnp.pad(lp, (0, B_pad - B), constant_values=-1)   # never matches
    lp = lp.reshape(B_pad, 1)

    kernel = functools.partial(
        _arc_margin_kernel,
        scale=float(scale),
        cos_m=math.cos(margin),
        sin_m=math.sin(margin),
        th=math.cos(math.pi - margin),
        mm=math.sin(math.pi - margin) * margin,
        easy_margin=bool(easy_margin),
        ls_eps=float(ls_eps),
        out_features=C,
        block_c=block_c,
    )

    # B-tile axis innermost: W block index (j) is constant across consecutive
    # steps, so each W tile is DMA'd from HBM exactly once.  Both axes are
    # "parallel" so megacore can shard the outer C-tile axis across cores.
    grid = (C_pad // block_c, B_pad // block_b)

    # Real double-buffered tile bytes (inputs + output) + headroom.
    mm_isz = matmul_dtype.itemsize
    out_isz = jnp.dtype(out_dtype).itemsize
    tile_bytes = 2 * (block_b * D * mm_isz           # xn tile
                      + block_c * D * mm_isz         # W tile
                      + block_c * 4                  # w_inv tile
                      + block_b * 4                  # label tile
                      + block_b * block_c * out_isz)  # out tile
    # Ceiling kept at 64 MiB (v7x per-TC VMEM); raise toward ~96 MiB on
    # v5e/v6e (128 MiB parts) if using very large block_c.
    vmem_limit = int(min(max(tile_bytes + (4 << 20), 32 << 20), 64 << 20))

    out = pl.pallas_call(
        kernel,
        out_shape=jax.ShapeDtypeStruct((B_pad, C_pad), out_dtype),
        grid=grid,
        in_specs=[
            pl.BlockSpec((block_b, D), lambda j, i: (i, 0)),   # xn rows
            pl.BlockSpec((block_c, D), lambda j, i: (j, 0)),   # W rows (C tile)
            pl.BlockSpec((1, block_c), lambda j, i: (0, j)),   # 1/||w||
            pl.BlockSpec((block_b, 1), lambda j, i: (i, 0)),   # labels
        ],
        out_specs=pl.BlockSpec((block_b, block_c), lambda j, i: (i, j)),
        compiler_params=pltpu.CompilerParams(
            dimension_semantics=("parallel", "parallel"),
            vmem_limit_bytes=vmem_limit),
    )(xn, wp, w_inv, lp)

    return out[:B, :C]


def _xavier_uniform(key, out_features, in_features):
    bound = math.sqrt(6.0 / (in_features + out_features))
    return jax.random.uniform(key, (out_features, in_features),
                              dtype=jnp.float32, minval=-bound, maxval=bound)


def _reference(x, weight, label, *, scale=30.0, margin=0.5,
               easy_margin=False, ls_eps=0.0):
    """Plain-JAX f32 reimplementation of the PyTorch module."""
    eps = 1e-12
    xn = x / jnp.maximum(jnp.linalg.norm(x, axis=-1, keepdims=True), eps)
    wn = weight / jnp.maximum(jnp.linalg.norm(weight, axis=-1, keepdims=True), eps)
    cosine = xn @ wn.T
    sine = jnp.sqrt(jnp.maximum(1.0 - cosine ** 2, 0.0))
    cos_m, sin_m = math.cos(margin), math.sin(margin)
    th = math.cos(math.pi - margin)
    mm = math.sin(math.pi - margin) * margin
    phi = cosine * cos_m - sine * sin_m
    phi = jnp.where(cosine > 0, phi, cosine) if easy_margin else \
        jnp.where(cosine > th, phi, cosine - mm)
    one_hot = jax.nn.one_hot(label, weight.shape[0], dtype=jnp.float32)
    if ls_eps > 0:
        one_hot = (1 - ls_eps) * one_hot + ls_eps / weight.shape[0]
    return (one_hot * phi + (1.0 - one_hot) * cosine) * scale


if __name__ == "__main__":
    key = jax.random.PRNGKey(0)
    kx, kw, kl, k2x, k2w, k2l = jax.random.split(key, 6)

    # Case 1: module-like small shapes (single tile), f32 matmul for parity.
    B, D, C = 8, 32, 128
    x = jax.random.normal(kx, (B, D), dtype=jnp.float32)
    weight = _xavier_uniform(kw, C, D)
    label = jax.random.randint(kl, (B,), 0, C, dtype=jnp.int32)

    out = jax.block_until_ready(
        arc_margin_product(x, weight, label, scale=30.0, margin=0.5,
                           matmul_dtype=jnp.float32))
    ref = _reference(x, weight, label, scale=30.0, margin=0.5)
    assert out.shape == (B, C)
    assert jnp.allclose(out, ref, atol=5e-4, rtol=5e-4), \
        f"max err {jnp.max(jnp.abs(out - ref))}"

    # Label-smoothing + easy-margin paths (f32 matmul, tight tolerance).
    out_ls = jax.block_until_ready(
        arc_margin_product(x, weight, label, ls_eps=0.1, easy_margin=True,
                           matmul_dtype=jnp.float32))
    ref_ls = _reference(x, weight, label, ls_eps=0.1, easy_margin=True)
    assert jnp.allclose(out_ls, ref_ls, atol=5e-4, rtol=5e-4), \
        f"max err {jnp.max(jnp.abs(out_ls - ref_ls))}"

    # Case 2: multiple grid tiles in both B and C (exercises the label-shift
    # column indexing, the reordered grid, and the row/column padding paths).
    B2, D2, C2 = 20, 32, 384
    x2 = jax.random.normal(k2x, (B2, D2), dtype=jnp.float32)
    w2 = _xavier_uniform(k2w, C2, D2)
    l2 = jax.random.randint(k2l, (B2,), 0, C2, dtype=jnp.int32)

    out2 = jax.block_until_ready(
        arc_margin_product(x2, w2, l2, block_b=8, block_c=128,
                           matmul_dtype=jnp.float32))
    ref2 = _reference(x2, w2, l2)
    assert out2.shape == (B2, C2)
    assert jnp.allclose(out2, ref2, atol=5e-4, rtol=5e-4), \
        f"max err {jnp.max(jnp.abs(out2 - ref2))}"

    # Case 3: default bf16 matmul fast path (half the W HBM bytes, full-rate
    # MXU).  Non-target columns are pure scaled cosine: loose check against
    # the f32 reference (target columns excluded to avoid margin-threshold
    # branch sensitivity under bf16 rounding).
    out_bf16 = jax.block_until_ready(
        arc_margin_product(x2, w2, l2, block_b=8, block_c=128))
    assert out_bf16.shape == (B2, C2)
    assert bool(jnp.all(jnp.isfinite(out_bf16)))
    tgt = jax.nn.one_hot(l2, C2, dtype=jnp.bool_)
    diff = jnp.where(tgt, 0.0, jnp.abs(out_bf16 - ref2))
    assert float(jnp.max(diff)) < 0.3, f"bf16 max err {float(jnp.max(diff))}"

    # Case 4: bf16-weight storage (dominant HBM stream already halved at rest).
    out_bw = jax.block_until_ready(
        arc_margin_product(x2, w2.astype(jnp.bfloat16), l2,
                           block_b=8, block_c=128))
    assert out_bw.shape == (B2, C2)
    assert bool(jnp.all(jnp.isfinite(out_bw)))
    diff_bw = jnp.where(tgt, 0.0, jnp.abs(out_bw - ref2))
    assert float(jnp.max(diff_bw)) < 0.3, f"bf16-w max err {float(jnp.max(diff_bw))}"

    print("KERNEL_OK")
</pallas_src>

<mosaic_0001>
module attributes {stable_mosaic.version = 11 : i64} {
  func.func @_arc_margin_kernel(%arg0: i32, %arg1: i32, %arg2: memref<8x32xf32, #tpu.memory_space<vmem>>, %arg3: memref<128x32xf32, #tpu.memory_space<vmem>>, %arg4: memref<1x128xf32, #tpu.memory_space<vmem>>, %arg5: memref<8x1xi32, #tpu.memory_space<vmem>>, %arg6: memref<8x128xf32, #tpu.memory_space<vmem>>) attributes {dimension_semantics = [#tpu.dimension_semantics<parallel>, #tpu.dimension_semantics<parallel>], iteration_bounds = array<i64: 1, 1>, scalar_prefetch = 0 : i64, scratch_operands = 0 : i64, tpu.core_type = #tpu.core_type<tc>, window_params = [{transform_indices = @transform_0, window_bounds = array<i64: 8, 32>}, {transform_indices = @transform_1, window_bounds = array<i64: 128, 32>}, {transform_indices = @transform_2, window_bounds = array<i64: 1, 128>}, {transform_indices = @transform_3, window_bounds = array<i64: 8, 1>}, {transform_indices = @transform_4, window_bounds = array<i64: 8, 128>}]} {
    %c0 = arith.constant 0 : index
    %c0_0 = arith.constant 0 : index
    %0 = vector.load %arg2[%c0, %c0_0] : memref<8x32xf32, #tpu.memory_space<vmem>>, vector<8x32xf32>
    %c0_1 = arith.constant 0 : index
    %c0_2 = arith.constant 0 : index
    %1 = vector.load %arg3[%c0_1, %c0_2] : memref<128x32xf32, #tpu.memory_space<vmem>>, vector<128x32xf32>
    %cst = arith.constant dense<0.000000e+00> : vector<8x128xf32>
    %2 = tpu.matmul %0, %1, %cst {dimension_numbers = #tpu.dot_dimension_numbers<[1], [1], [0], [0], [0, 0, 1, 0], [], []>} : vector<8x32xf32>, vector<128x32xf32>, vector<8x128xf32> -> vector<8x128xf32>
    %c0_3 = arith.constant 0 : index
    %c0_4 = arith.constant 0 : index
    %3 = vector.load %arg4[%c0_3, %c0_4] : memref<1x128xf32, #tpu.memory_space<vmem>>, vector<1x128xf32>
    %4 = vector.broadcast %3 : vector<1x128xf32> to vector<8x128xf32>
    %5 = arith.mulf %2, %4 : vector<8x128xf32>
    %6 = arith.mulf %5, %5 : vector<8x128xf32>
    %cst_5 = arith.constant 1.000000e+00 : f32
    %7 = vector.broadcast %cst_5 : f32 to vector<8x128xf32>
    %8 = arith.subf %7, %6 : vector<8x128xf32>
    %cst_6 = arith.constant 0.000000e+00 : f32
    %9 = vector.broadcast %cst_6 : f32 to vector<8x128xf32>
    %10 = arith.maximumf %8, %9 : vector<8x128xf32>
    %11 = math.sqrt %10 : vector<8x128xf32>
    %cst_7 = arith.constant 0.87758255 : f32
    %12 = vector.broadcast %cst_7 : f32 to vector<8x128xf32>
    %13 = arith.mulf %5, %12 : vector<8x128xf32>
    %cst_8 = arith.constant 0.47942555 : f32
    %14 = vector.broadcast %cst_8 : f32 to vector<8x128xf32>
    %15 = arith.mulf %11, %14 : vector<8x128xf32>
    %16 = arith.subf %13, %15 : vector<8x128xf32>
    %cst_9 = arith.constant -0.87758255 : f32
    %17 = vector.broadcast %cst_9 : f32 to vector<8x128xf32>
    %18 = arith.cmpf ogt, %5, %17 : vector<8x128xf32>
    %cst_10 = arith.constant 0.239712775 : f32
    %19 = vector.broadcast %cst_10 : f32 to vector<8x128xf32>
    %20 = arith.subf %5, %19 : vector<8x128xf32>
    %21 = arith.select %18, %16, %20 : vector<8x128xi1>, vector<8x128xf32>
    %c0_11 = arith.constant 0 : index
    %c0_12 = arith.constant 0 : index
    %22 = vector.load %arg5[%c0_11, %c0_12] : memref<8x1xi32, #tpu.memory_space<vmem>>, vector<8x1xi32>
    %c128_i32 = arith.constant 128 : i32
    %23 = arith.muli %arg0, %c128_i32 : i32
    %24 = vector.broadcast %23 : i32 to vector<8x1xi32>
    %25 = arith.subi %22, %24 : vector<8x1xi32>
    %26 = tpu.iota {dimensions = array<i32: 1>} : vector<8x128xi32>
    %27 = vector.broadcast %25 : vector<8x1xi32> to vector<8x128xi32>
    %28 = arith.cmpi eq, %26, %27 : vector<8x128xi32>
    %29 = arith.select %28, %21, %5 : vector<8x128xi1>, vector<8x128xf32>
    %cst_13 = arith.constant 3.000000e+01 : f32
    %30 = vector.broadcast %cst_13 : f32 to vector<8x128xf32>
    %31 = arith.mulf %29, %30 : vector<8x128xf32>
    %c0_14 = arith.constant 0 : index
    %c0_15 = arith.constant 0 : index
    %32 = vector.load %arg6[%c0_14, %c0_15] : memref<8x128xf32, #tpu.memory_space<vmem>>, vector<8x128xf32>
    tpu.vector_store %arg6[%c0_14, %c0_15], %31 {strides = array<i32>} : memref<8x128xf32, #tpu.memory_space<vmem>>, vector<8x128xf32>,
    return
  }
  func.func @transform_0(%arg0: i32, %arg1: i32) -> (i32, i32) {
    %c0_i32 = arith.constant 0 : i32
    %c0_i32_0 = arith.constant 0 : i32
    return %arg1, %c0_i32 : i32, i32
  }
  func.func @transform_1(%arg0: i32, %arg1: i32) -> (i32, i32) {
    %c0_i32 = arith.constant 0 : i32
    %c0_i32_0 = arith.constant 0 : i32
    return %arg0, %c0_i32 : i32, i32
  }
  func.func @transform_2(%arg0: i32, %arg1: i32) -> (i32, i32) {
    %c0_i32 = arith.constant 0 : i32
    %c0_i32_0 = arith.constant 0 : i32
    return %c0_i32, %arg0 : i32, i32
  }
  func.func @transform_3(%arg0: i32, %arg1: i32) -> (i32, i32) {
    %c0_i32 = arith.constant 0 : i32
    %c0_i32_0 = arith.constant 0 : i32
    return %arg1, %c0_i32 : i32, i32
  }
  func.func @transform_4(%arg0: i32, %arg1: i32) -> (i32, i32) {
    %c0_i32 = arith.constant 0 : i32
    return %arg1, %arg0 : i32, i32
  }
}

</mosaic_0001>

<llo_original>
// kernel: tpu_custom_call.1
$region0: #{tpu_custom_call.1}
  #allocation0 [shape = 'u32[]', space=smem, size = 0x4, offset = 0x4, fixed_abs, tag = 'smem constant byte address 0x4 - core index']
  #allocation1 [shape = 'u32[144,128]{1,0:T(1,128)}', space=vmem, size = 0x12000, scoped, tag = 'internal scratch']
  %s0 = inlined_call_operand.vmem [shape: f32[8,32], index: 0, kind: input, shape index: {}]
  %s1 = inlined_call_operand.vmem [shape: f32[128,32], index: 1, kind: input, shape index: {}]
  %s2 = inlined_call_operand.vmem [shape: f32[1,128], index: 2, kind: input, shape index: {}]
  %s3 = inlined_call_operand.vmem [shape: s32[8,1], index: 3, kind: input, shape index: {}]
  %s4 = inlined_call_operand.hbm [shape: f32[8,128], index: 4, kind: output, shape index: {}]
  %s5 = sld [smem:[#allocation0]]
  $region26: #{tpu_custom_call.1} parent=0
    _
  %s7 = ssub.s32 1, %s5
  %s8 = scalar_select 0, %s7, %s5
  $region1: #{tpu_custom_call.1} parent=0
    #allocation2 [shape = 'u8[4096]{0}', space=vmem, size = 0x1000, scoped, tag = 'output window, operand 0, single buffered']
    #allocation3 [shape = 's32[1]{0}', space=sflag, size = 0x4, scoped, tag = 'scoped memory for tpu_custom_call.1']
    %9 = vsyncpa [#allocation3], 0
    // Predicated region
    $region2: #{tpu_custom_call.1} parent=1 // pred_check
      _
    $region3: #{tpu_custom_call.1} parent=1 // pred_check_branch
      %11 = sbr.rel (0) target = $region5
    $region4: #{tpu_custom_call.1} parent=1 // pred_region
      _
    $region5: #{tpu_custom_call.1} parent=1 // pred_fallthru
      _
    // Predicated region
    $region6: #{tpu_custom_call.1} parent=1 // pred_check
      _
    $region7: #{tpu_custom_call.1} parent=1 // pred_check_branch
      %13 = sbr.rel (0) target = $region9
    $region8: #{tpu_custom_call.1} parent=1 // pred_region
      _
    $region9: #{tpu_custom_call.1} parent=1 // pred_fallthru
      _
    // Predicated region
    $region10: #{tpu_custom_call.1} parent=1 // pred_check
      _
    $region11: #{tpu_custom_call.1} parent=1 // pred_check_branch
      %15 = sbr.rel (0) target = $region13
    $region12: #{tpu_custom_call.1} parent=1 // pred_region
      _
    $region13: #{tpu_custom_call.1} parent=1 // pred_fallthru
      _
    // Predicated region
    $region14: #{tpu_custom_call.1} parent=1 // pred_check
      _
    $region15: #{tpu_custom_call.1} parent=1 // pred_check_branch
      %17 = sbr.rel (0) target = $region17
    $region16: #{tpu_custom_call.1} parent=1 // pred_region
      _
    $region17: #{tpu_custom_call.1} parent=1 // pred_fallthru
      _
    %v18 = vld [vmem:[%s0] sm:$0xff]
    %v19 = vld [vmem:[%s1] sm:$0xff]
    %v20 = vld [vmem:[%s1 + $0x8] sm:$0xff]
    %v21 = vld [vmem:[%s1 + $0x10] sm:$0xff]
    %v22 = vld [vmem:[%s1 + $0x18] sm:$0xff]
    %v23 = vld [vmem:[%s1 + $0x20] sm:$0xff]
    %v24 = vld [vmem:[%s1 + $0x28] sm:$0xff]
    %v25 = vld [vmem:[%s1 + $0x30] sm:$0xff]
    %v26 = vld [vmem:[%s1 + $0x38] sm:$0xff]
    %v27 = vld [vmem:[%s1 + $0x40] sm:$0xff]
    %v28 = vld [vmem:[%s1 + $0x48] sm:$0xff]
    %v29 = vld [vmem:[%s1 + $0x50] sm:$0xff]
    %v30 = vld [vmem:[%s1 + $0x58] sm:$0xff]
    %v31 = vld [vmem:[%s1 + $0x60] sm:$0xff]
    %v32 = vld [vmem:[%s1 + $0x68] sm:$0xff]
    %v33 = vld [vmem:[%s1 + $0x70] sm:$0xff]
    %v34 = vld [vmem:[%s1 + $0x78] sm:$0xff]
    %vm35 = vcmask 261120
    %v37 = vsel %vm35, %v18, 0
    %v40 = vsel %vm35, %v19, 0
    %v43 = vsel %vm35, %v20, 0
    %v46 = vsel %vm35, %v21, 0
    %v49 = vsel %vm35, %v22, 0
    %v52 = vsel %vm35, %v23, 0
    %v55 = vsel %vm35, %v24, 0
    %v58 = vsel %vm35, %v25, 0
    %v61 = vsel %vm35, %v26, 0
    %v64 = vsel %vm35, %v27, 0
    %v67 = vsel %vm35, %v28, 0
    %v70 = vsel %vm35, %v29, 0
    %v73 = vsel %vm35, %v30, 0
    %v76 = vsel %vm35, %v31, 0
    %v79 = vsel %vm35, %v32, 0
    %v82 = vsel %vm35, %v33, 0
    %v85 = vsel %vm35, %v34, 0
    %87 = vmatprep.subr.mxu0 0.0
    %88 = vmatpush1.xpose.msra.mxu0 %v85
    %89 = vmatprep.subr.mxu0 0.0
    %90 = vmatpush1.xpose.msra.mxu0 %v82
    %91 = vmatprep.subr.mxu0 0.0
    %92 = vmatpush1.xpose.msra.mxu0 %v79
    %93 = vmatprep.subr.mxu0 0.0
    %94 = vmatpush1.xpose.msra.mxu0 %v76
    %95 = vmatprep.subr.mxu0 0.0
    %96 = vmatpush1.xpose.msra.mxu0 %v73
    %97 = vmatprep.subr.mxu0 0.0
    %98 = vmatpush1.xpose.msra.mxu0 %v70
    %99 = vmatprep.subr.mxu0 0.0
    %100 = vmatpush1.xpose.msra.mxu0 %v67
    %101 = vmatprep.subr.mxu0 0.0
    %102 = vmatpush1.xpose.msra.mxu0 %v64
    %103 = vmatprep.subr.mxu0 0.0
    %104 = vmatpush1.xpose.msra.mxu0 %v61
    %105 = vmatprep.subr.mxu0 0.0
    %106 = vmatpush1.xpose.msra.mxu0 %v58
    %107 = vmatprep.subr.mxu0 0.0
    %108 = vmatpush1.xpose.msra.mxu0 %v55
    %109 = vmatprep.subr.mxu0 0.0
    %110 = vmatpush1.xpose.msra.mxu0 %v52
    %111 = vmatprep.subr.mxu0 0.0
    %112 = vmatpush1.xpose.msra.mxu0 %v49
    %113 = vmatprep.subr.mxu0 0.0
    %114 = vmatpush1.xpose.msra.mxu0 %v46
    %115 = vmatprep.subr.mxu0 0.0
    %116 = vmatpush1.xpose.msra.mxu0 %v43
    %117 = vmatprep.subr.mxu0 0.0
    %118 = vmatpush1.xpose.msra.mxu0 %v40
    %119 = vmatprep.subr.mxu0 0.0
    %120 = vmatpush2.xpose.msra.mxu0 0.0
    %121 = vmatprep.subr.mxu0 0.0
    %122 = vmatpush2.xpose.msra.mxu0 0.0
    %123 = vmatprep.subr.mxu0 0.0
    %124 = vmatpush2.xpose.msra.mxu0 0.0
    %125 = vmatprep.subr.mxu0 0.0
    %126 = vmatpush2.xpose.msra.mxu0 0.0
    %127 = vmatprep.subr.mxu0 0.0
    %128 = vmatpush2.xpose.msra.mxu0 0.0
    %129 = vmatprep.subr.mxu0 0.0
    %130 = vmatpush2.xpose.msra.mxu0 0.0
    %131 = vmatprep.subr.mxu0 0.0
    %132 = vmatpush2.xpose.msra.mxu0 0.0
    %133 = vmatprep.subr.mxu0 0.0
    %134 = vmatpush2.xpose.msra.mxu0 0.0
    %135 = vmatprep.subr.mxu0 0.0
    %136 = vmatpush2.xpose.msra.mxu0 0.0
    %137 = vmatprep.subr.mxu0 0.0
    %138 = vmatpush2.xpose.msra.mxu0 0.0
    %139 = vmatprep.subr.mxu0 0.0
    %140 = vmatpush2.xpose.msra.mxu0 0.0
    %141 = vmatprep.subr.mxu0 0.0
    %142 = vmatpush2.xpose.msra.mxu0 0.0
    %143 = vmatprep.subr.mxu0 0.0
    %144 = vmatpush2.xpose.msra.mxu0 0.0
    %145 = vmatprep.subr.mxu0 0.0
    %146 = vmatpush2.xpose.msra.mxu0 0.0
    %147 = vmatprep.subr.mxu0 0.0
    %148 = vmatpush2.xpose.msra.mxu0 0.0
    %149 = vmatprep.subr.mxu0 0.0
    %150 = vmatpush2.xpose.msra.mxu0 0.0
    %151 = vmatprep.mubr.f32.mxu0 0.0
    %152 = vmatmul.mubr.f32.gmra.mxu0 %v37
    %v153 = vpop.f32.mrf.mxu0
    %v154 = vadd.f32 0.0, %v153
    %v155 = vpop.f32.mrf.mxu0
    %156 = vdwg.mxu0
    %v157 = vld [vmem:[%s2] sm:$0x1]
    %v159 = vlaneseq
    %v160 = vshrl.u32 %v159, 7
    %v161 = vsub.s32 0, %v160
    %v162 = vrot.slane %v157, %v161
    %v164 = vmul.f32 %v154, %v162
    %v165 = vmul.f32 %v164, %v164
    %v166 = vsub.f32 1.0, %v165
    %v167 = vmax.f32 %v166, 0.0
    %v168 = vrsqrt.pop %v167
    %v169 = vmul.f32 %v167, %v168
    %vm170 = vcmp.eq.f32.partialorder %v167, inf
    %v171 = vsel %vm170, %v167, %v169
    %vm172 = vcmp.eq.f32.partialorder %v167, 0.0
    %v173 = vand.u32 %v167, 2147483648
    %v174 = vsel %vm172, %v173, %v171
    %v175 = vmul.f32 %v164, 0.87758255
    %v176 = vmul.f32 %v174, 0.47942555
    %v177 = vsub.f32 %v175, %v176
    %vm178 = vcmp.gt.f32.partialorder %v164, -0.87758255
    %v179 = vsub.f32 %v164, 0.23971277
    %v180 = vsel %vm178, %v177, %v179
    %v181 = vld [vmem:[%s3] sm:$0xff]
    %s182 = smul.u32 0, 128
    %v183 = vstv %s182
    %v184 = vsub.s32 %v181, %v183
    %v185 = vlaneseq
    %v186 = vand.u32 %v185, 127
    %187 = vset.pattern.permute.xlu0 0
    %188 = vperm.xlu0 %187, %v184
    %v189 = vpop.permute.xlu0 %188
    %vm190 = vcmp.eq.s32.totalorder %v186, %v189
    %v191 = vsel %vm190, %v180, %v164
    %v192 = vmul.f32 %v191, 30.0
    %193 = vst [vmem:[#allocation2] sm:$0xff] %v192
    // Predicated region
    $region18: #{tpu_custom_call.1} parent=1 // pred_check
      _
    $region19: #{tpu_custom_call.1} parent=1 // pred_check_branch
      %195 = sbr.rel (0) target = $region21
    $region20: #{tpu_custom_call.1} parent=1 // pred_region
      %s197 = ssub.s32 128, 128
      %198 = vsyncadd [#allocation3], %s197
      %s200 = sshll.u32 [#allocation2], 4
      %s201 = int_to_ptr.vmem [resolvable:$true] %s200
      %203 = dma.vmem_to_hbm [thread:$0]  %s201, 128, %s4, [#allocation3]
    $region21: #{tpu_custom_call.1} parent=1 // pred_fallthru
      _
    // Predicated region
    $region22: #{tpu_custom_call.1} parent=1 // pred_check
      _
    $region23: #{tpu_custom_call.1} parent=1 // pred_check_branch
      %205 = sbr.rel (0) target = $region25
    $region24: #{tpu_custom_call.1} parent=1 // pred_region
      %206 = dma.done [#allocation3], 128
    $region25: #{tpu_custom_call.1} parent=1 // pred_fallthru
      _
    %207 = vsyncpa [#allocation3], 1

</llo_original>
